<compile_context>
chip_gen: v7x
topology: tpu7x:2x2x1
jax: 0.10.0
libtpu: 0.0.40
codegen_flags: <defaults>
</compile_context>

<pallas_src>
import jax
import jax.numpy as jnp
from jax.experimental import pallas as pl
from jax.experimental.pallas import tpu as pltpu

_LANE = 128
# ~8 MiB f32 output tile; amortizes the ~0.35us/grid-step overhead on all
# generations while keeping double-buffered in+out well under v7x VMEM.
_TARGET_TILE_ELEMS = 2 * 1024 * 1024
_VMEM_LIMIT_BYTES = 48 * 1024 * 1024


def _round_up(x, m):
    return ((x + m - 1) // m) * m


def _round_down(x, m):
    return (x // m) * m


def _sublane_unit(dtype):
    """Native sublane packing: (8,128) f32, (16,128) bf16/f16, (32,128) 8-bit."""
    itemsize = jnp.dtype(dtype).itemsize
    if itemsize >= 4:
        return 8
    if itemsize == 2:
        return 16
    return 32


def _choose_tiles(R, L, sub):
    """Pick (tm, tk): tm multiple of `sub`, tk multiple of 128, tm*tk ~ budget.

    When R (=N*C) is small, tk grows toward L so the tile still reaches the
    byte budget instead of collapsing to a tiny, overhead-dominated block.
    """
    R_pad = _round_up(R, sub)
    L_pad = _round_up(L, _LANE)
    if R_pad * L_pad <= _TARGET_TILE_ELEMS:
        return R_pad, L_pad
    tk = min(L_pad, max(_LANE, _round_down(_TARGET_TILE_ELEMS // sub, _LANE)))
    tm = min(R_pad, max(sub, _round_down(_TARGET_TILE_ELEMS // tk, sub)))
    return tm, tk


def _normalize_kernel(x_ref, scale_ref, bias_ref, o_ref):
    # x_ref: (tm, tk) block in the input's NATIVE dtype; cast in-register.
    # scale_ref / bias_ref: fully-resident (rows_pad, 1) f32 columns; slice the
    # rows of the current block (sublane-aligned VMEM slice, no extra DMA).
    tm = o_ref.shape[0]
    r0 = pl.multiple_of(pl.program_id(0) * tm, tm)
    scale = scale_ref[pl.ds(r0, tm), :]
    bias = bias_ref[pl.ds(r0, tm), :]
    x = x_ref[...].astype(jnp.float32)
    o_ref[...] = (x * scale + bias).astype(o_ref.dtype)


def _normalize_array(x, mean_arr, std_arr, out_dtype):
    N, C, H, W = x.shape
    R, L = N * C, H * W
    assert mean_arr.shape == (C,) and std_arr.shape == (C,)

    sub = _sublane_unit(x.dtype)
    tm, tk = _choose_tiles(R, L, sub)
    grid_r = pl.cdiv(R, tm)
    grid_l = pl.cdiv(L, tk)

    # v7x megacore: if the grid collapsed to a single block but the lane axis
    # can be split, split it so both TensorCores get work (no-op on 1-TC chips).
    if grid_r == 1 and grid_l == 1 and tk >= 2 * _LANE:
        tk = _round_up(pl.cdiv(tk, 2), _LANE)
        grid_l = pl.cdiv(L, tk)

    # Per-row (row r = n*C + c) affine params: out = x*(1/std) + (-mean/std).
    inv_std = 1.0 / std_arr
    scale_rows = jnp.tile(inv_std, N)                    # (R,)
    bias_rows = jnp.tile(-mean_arr * inv_std, N)         # (R,)
    rows_pad = grid_r * tm                               # covers every block
    if rows_pad > R:
        scale_rows = jnp.pad(scale_rows, (0, rows_pad - R))
        bias_rows = jnp.pad(bias_rows, (0, rows_pad - R))
    scale_col = scale_rows.reshape(rows_pad, 1).astype(jnp.float32)
    bias_col = bias_rows.reshape(rows_pad, 1).astype(jnp.float32)

    x2d = x.reshape(R, L)   # lane-dense, contiguous (free) 2-D view of NCHW

    out2d = pl.pallas_call(
        _normalize_kernel,
        out_shape=jax.ShapeDtypeStruct((R, L), out_dtype),
        grid=(grid_r, grid_l),
        in_specs=[
            pl.BlockSpec((tm, tk), lambda i, j: (i, j)),       # x, native dtype
            pl.BlockSpec((rows_pad, 1), lambda i, j: (0, 0)),  # 1/std (resident)
            pl.BlockSpec((rows_pad, 1), lambda i, j: (0, 0)),  # -mean/std
        ],
        out_specs=pl.BlockSpec((tm, tk), lambda i, j: (i, j)),
        compiler_params=pltpu.CompilerParams(
            dimension_semantics=("parallel", "parallel"),
            vmem_limit_bytes=_VMEM_LIMIT_BYTES,
        ),
    )(x2d, scale_col, bias_col)

    return out2d.reshape(N, C, H, W)


def normalize(liver_imgs, mean, std, liver_mask=None, out_dtype=jnp.float32):
    """JAX/Pallas equivalent of Normalize.forward.

    liver_imgs: (N, C, H, W) array or a list of such arrays (concatenated
                along N, as torch.cat does). Any dtype; the float() cast is
                fused into the kernel.
    Returns (normalized_imgs, liver_mask). out_dtype defaults to float32 for
    parity with `.float()`; pass jnp.bfloat16 to halve HBM write traffic.
    """
    mean_arr = jnp.asarray(mean, dtype=jnp.float32)
    std_arr = jnp.asarray(std, dtype=jnp.float32)

    if isinstance(liver_imgs, (list, tuple)):
        # torch.cat semantics without a pre-kernel HBM concat of the inputs:
        # run the kernel per array and concatenate the normalized results.
        outs = [_normalize_array(a, mean_arr, std_arr, out_dtype)
                for a in liver_imgs]
        return jnp.concatenate(outs, axis=0), liver_mask

    return _normalize_array(liver_imgs, mean_arr, std_arr, out_dtype), liver_mask


if __name__ == "__main__":
    key = jax.random.PRNGKey(0)
    k1, k2, k3 = jax.random.split(key, 3)

    # --- primary case: (N, C, H, W) = (2, 4, 16, 16), f32 input --------------
    N, C, H, W = 2, 4, 16, 16
    imgs = jax.random.uniform(k1, (N, C, H, W), dtype=jnp.float32) * 255.0
    mask = (jax.random.uniform(k2, (N, 1, H, W)) > 0.5).astype(jnp.float32)
    mean = [0.485, 0.456, 0.406, 0.5]
    std = [0.229, 0.224, 0.225, 0.25]

    out, out_mask = normalize(imgs, mean, std, liver_mask=mask)
    out = jax.block_until_ready(out)

    m = jnp.asarray(mean, jnp.float32)[None, :, None, None]
    s = jnp.asarray(std, jnp.float32)[None, :, None, None]
    ref = (imgs.astype(jnp.float32) - m) / s
    assert out.shape == (N, C, H, W) and out.dtype == jnp.float32
    assert jnp.allclose(out, ref, rtol=1e-5, atol=1e-4)
    assert out_mask is mask  # mask passed through untouched

    # --- ragged case: dims not multiples of (8, 128), list-of-arrays input ---
    N2, C2, H2, W2 = 1, 3, 15, 17
    imgs2 = jax.random.uniform(k3, (N2, C2, H2, W2), dtype=jnp.float32) * 255.0
    mean3 = [0.485, 0.456, 0.406]
    std3 = [0.229, 0.224, 0.225]
    out2, _ = normalize([imgs2, imgs2], mean3, std3)
    out2 = jax.block_until_ready(out2)
    m3 = jnp.asarray(mean3, jnp.float32)[None, :, None, None]
    s3 = jnp.asarray(std3, jnp.float32)[None, :, None, None]
    ref2 = (jnp.concatenate([imgs2, imgs2], axis=0) - m3) / s3
    assert out2.shape == (2 * N2, C2, H2, W2) and out2.dtype == jnp.float32
    assert jnp.allclose(out2, ref2, rtol=1e-5, atol=1e-4)

    print("KERNEL_OK")
</pallas_src>

<mosaic_0001>
module attributes {stable_mosaic.version = 11 : i64} {
  func.func @_normalize_kernel(%arg0: i32, %arg1: i32, %arg2: memref<8x128xf32, #tpu.memory_space<vmem>>, %arg3: memref<8x1xf32, #tpu.memory_space<vmem>>, %arg4: memref<8x1xf32, #tpu.memory_space<vmem>>, %arg5: memref<8x128xf32, #tpu.memory_space<vmem>>) attributes {dimension_semantics = [#tpu.dimension_semantics<parallel>, #tpu.dimension_semantics<parallel>], iteration_bounds = array<i64: 1, 2>, scalar_prefetch = 0 : i64, scratch_operands = 0 : i64, tpu.core_type = #tpu.core_type<tc>, window_params = [{transform_indices = @transform_0, window_bounds = array<i64: 8, 128>}, {pipeline_mode = #tpu.pipeline_mode<synchronous>, transform_indices = @transform_1, window_bounds = array<i64: 8, 1>}, {pipeline_mode = #tpu.pipeline_mode<synchronous>, transform_indices = @transform_2, window_bounds = array<i64: 8, 1>}, {transform_indices = @transform_3, window_bounds = array<i64: 8, 128>}]} {
    %c8_i32 = arith.constant 8 : i32
    %0 = arith.muli %arg0, %c8_i32 : i32
    %1 = tpu.assume_multiple %0, 8 : i32
    %2 = arith.index_cast %1 : i32 to index
    %c0 = arith.constant 0 : index
    %3 = vector.load %arg3[%2, %c0] : memref<8x1xf32, #tpu.memory_space<vmem>>, vector<8x1xf32>
    %4 = arith.index_cast %1 : i32 to index
    %c0_0 = arith.constant 0 : index
    %5 = vector.load %arg4[%4, %c0_0] : memref<8x1xf32, #tpu.memory_space<vmem>>, vector<8x1xf32>
    %c0_1 = arith.constant 0 : index
    %c0_2 = arith.constant 0 : index
    %6 = vector.load %arg2[%c0_1, %c0_2] : memref<8x128xf32, #tpu.memory_space<vmem>>, vector<8x128xf32>
    %7 = vector.broadcast %3 : vector<8x1xf32> to vector<8x128xf32>
    %8 = arith.mulf %6, %7 : vector<8x128xf32>
    %9 = vector.broadcast %5 : vector<8x1xf32> to vector<8x128xf32>
    %10 = arith.addf %8, %9 : vector<8x128xf32>
    %c0_3 = arith.constant 0 : index
    %c0_4 = arith.constant 0 : index
    %11 = vector.load %arg5[%c0_3, %c0_4] : memref<8x128xf32, #tpu.memory_space<vmem>>, vector<8x128xf32>
    tpu.vector_store %arg5[%c0_3, %c0_4], %10 {strides = array<i32>} : memref<8x128xf32, #tpu.memory_space<vmem>>, vector<8x128xf32>,
    return
  }
  func.func @transform_0(%arg0: i32, %arg1: i32) -> (i32, i32) {
    %c0_i32 = arith.constant 0 : i32
    return %arg0, %arg1 : i32, i32
  }
  func.func @transform_1(%arg0: i32, %arg1: i32) -> (i32, i32) {
    %c0_i32 = arith.constant 0 : i32
    %c0_i32_0 = arith.constant 0 : i32
    %c0_i32_1 = arith.constant 0 : i32
    return %c0_i32, %c0_i32_0 : i32, i32
  }
  func.func @transform_2(%arg0: i32, %arg1: i32) -> (i32, i32) {
    %c0_i32 = arith.constant 0 : i32
    %c0_i32_0 = arith.constant 0 : i32
    %c0_i32_1 = arith.constant 0 : i32
    return %c0_i32, %c0_i32_0 : i32, i32
  }
  func.func @transform_3(%arg0: i32, %arg1: i32) -> (i32, i32) {
    %c0_i32 = arith.constant 0 : i32
    return %arg0, %arg1 : i32, i32
  }
}

</mosaic_0001>

<llo_original>
// kernel: tpu_custom_call.1
$region0: #{tpu_custom_call.1}
  #allocation0 [shape = 'u32[]', space=smem, size = 0x4, offset = 0x4, fixed_abs, tag = 'smem constant byte address 0x4 - core index']
  #allocation1 [shape = 'u32[144,128]{1,0:T(1,128)}', space=vmem, size = 0x12000, scoped, tag = 'internal scratch']
  %s0 = inlined_call_operand.vmem [shape: f32[8,256], index: 0, kind: input, shape index: {}]
  %s1 = inlined_call_operand.vmem [shape: f32[8,1], index: 1, kind: input, shape index: {}]
  %s2 = inlined_call_operand.vmem [shape: f32[8,1], index: 2, kind: input, shape index: {}]
  %s3 = inlined_call_operand.hbm [shape: f32[8,256], index: 3, kind: output, shape index: {}]
  %s4 = sld [smem:[#allocation0]]
  $region45: #{tpu_custom_call.1} parent=0
    _
  %s6 = ssub.s32 1, %s4
  %s7 = scalar_select 0, %s6, %s4
  $region1: #{tpu_custom_call.1} parent=0
    #allocation2 [shape = 'u8[8192]{0}', space=vmem, size = 0x2000, scoped, tag = 'output window, operand 0']
    #allocation3 [shape = 's32[2]{0}', space=sflag, size = 0x8, scoped, tag = 'scoped memory for tpu_custom_call.1']
    %8 = vsyncpa [#allocation3], 0
    %s9 = scalar_lea.sflag [#allocation3], 1
    %10 = vsyncpa %s9, 0
    loop: start=0, step=1, limit=4
    $region2: #{tpu_custom_call.1} parent=1 // loop_pre_header
      _
    $region3: #{tpu_custom_call.1} parent=1 // loop_header
      %s12 = sphi 0, %s16
      %p13 = scmp.ge.s32.totalorder %s12, 4
      %s19 = sphi 0, %s31
      %s20 = sphi 0, %s27
      %s21 = sphi 0, %s19
      %s22 = sphi 0, %s20
      %s23 = sphi 0, %s21
      %s24 = sphi 0, %s22
      %s36 = sphi 0, %s38
      %s39 = sphi 0, %s36
      %s40 = sphi 0, %s39
      %s56 = sphi 0, %s40
      %s60 = sphi 0, %s60
      %s62 = sphi 0, %s60
      %s63 = sphi 0, %s62
      %s77 = sphi 0, %s63
      %s81 = sphi 0, %s81
      %s83 = sphi 0, %s81
      %s84 = sphi 0, %s83
      %s98 = sphi 0, %s84
      %s106 = sphi 0, %s108
      %s109 = sphi 0, %s106
      %s110 = sphi 0, %s109
      %s126 = sphi 0, %s110
    $region4: #{tpu_custom_call.1} parent=1 // loop_header_branch
      %15 = sbr.rel (%p13) target = $region8
    $region5: #{tpu_custom_call.1} parent=1 // loop_body
      %s17 = ssub.s32 %s12, 1
      %s18 = ssub.s32 %s12, 2
      %s25 = sadd.s32 1, %s20
      %p26 = scmp.ge.s32.totalorder %s25, 2
      %s27 = scalar_select %p26, 0, %s25
      %s28 = sadd.s32 1, %s19
      %s29 = scalar_select %p26, %s28, %s19
      %p30 = scmp.ge.s32.totalorder %s29, 1
      %s31 = scalar_select %p30, 0, %s29
      %s32 = ssub.s32 %s19, %s31
      %s33 = ssub.s32 %s20, %s27
      %s34 = sor.u32 %s32, %s33
      %p35 = scmp.eq.s32.totalorder %s34, 0
      %s37 = sadd.s32 %s36, 1
      %s38 = scalar_select %p35, %s36, %s37
      %p41 = pneg %p35
      %p42 = scmp.eq.s32.totalorder %s12, 1
      %p43 = por %p41, %p42
      %p44 = scmp.ne.s32.totalorder %s36, %s39
      %p45 = scmp.eq.s32.totalorder %s12, 0
      %p46 = por %p44, %p45
      %p47 = scmp.ne.s32.totalorder %s36, %s39
      %p48 = scmp.eq.s32.totalorder %s17, 1
      %p49 = por %p47, %p48
      %p50 = scmp.ne.s32.totalorder %s39, %s40
      %p51 = scmp.eq.s32.totalorder %s17, 0
      %p52 = por %p50, %p51
      %p53 = scmp.ne.s32.totalorder %s39, %s40
      %p54 = scmp.eq.s32.totalorder %s18, 1
      %p55 = por %p53, %p54
      %p57 = scmp.ne.s32.totalorder %s40, %s56
      %p58 = scmp.eq.s32.totalorder %s18, 0
      %p59 = por %p57, %p58
      %s61 = sadd.s32 %s60, 1
      %p64 = scmp.eq.s32.totalorder %s12, 1
      %p65 = scmp.ne.s32.totalorder %s60, %s62
      %p66 = scmp.eq.s32.totalorder %s12, 0
      %p67 = por %p65, %p66
      %p68 = scmp.ne.s32.totalorder %s60, %s62
      %p69 = scmp.eq.s32.totalorder %s17, 1
      %p70 = por %p68, %p69
      %p71 = scmp.ne.s32.totalorder %s62, %s63
      %p72 = scmp.eq.s32.totalorder %s17, 0
      %p73 = por %p71, %p72
      %p74 = scmp.ne.s32.totalorder %s62, %s63
      %p75 = scmp.eq.s32.totalorder %s18, 1
      %p76 = por %p74, %p75
      %p78 = scmp.ne.s32.totalorder %s63, %s77
      %p79 = scmp.eq.s32.totalorder %s18, 0
      %p80 = por %p78, %p79
      %s82 = sadd.s32 %s81, 1
      %p85 = scmp.eq.s32.totalorder %s12, 1
      %p86 = scmp.ne.s32.totalorder %s81, %s83
      %p87 = scmp.eq.s32.totalorder %s12, 0
      %p88 = por %p86, %p87
      %p89 = scmp.ne.s32.totalorder %s81, %s83
      %p90 = scmp.eq.s32.totalorder %s17, 1
      %p91 = por %p89, %p90
      %p92 = scmp.ne.s32.totalorder %s83, %s84
      %p93 = scmp.eq.s32.totalorder %s17, 0
      %p94 = por %p92, %p93
      %p95 = scmp.ne.s32.totalorder %s83, %s84
      %p96 = scmp.eq.s32.totalorder %s18, 1
      %p97 = por %p95, %p96
      %p99 = scmp.ne.s32.totalorder %s84, %s98
      %p100 = scmp.eq.s32.totalorder %s18, 0
      %p101 = por %p99, %p100
      %s102 = ssub.s32 %s19, %s31
      %s103 = ssub.s32 %s20, %s27
      %s104 = sor.u32 %s102, %s103
      %p105 = scmp.eq.s32.totalorder %s104, 0
      %s107 = sadd.s32 %s106, 1
      %s108 = scalar_select %p105, %s106, %s107
      %p111 = pneg %p105
      %p112 = scmp.eq.s32.totalorder %s12, 1
      %p113 = por %p111, %p112
      %p114 = scmp.ne.s32.totalorder %s106, %s109
      %p115 = scmp.eq.s32.totalorder %s12, 0
      %p116 = por %p114, %p115
      %p117 = scmp.ne.s32.totalorder %s106, %s109
      %p118 = scmp.eq.s32.totalorder %s17, 1
      %p119 = por %p117, %p118
      %p120 = scmp.ne.s32.totalorder %s109, %s110
      %p121 = scmp.eq.s32.totalorder %s17, 0
      %p122 = por %p120, %p121
      %p123 = scmp.ne.s32.totalorder %s109, %s110
      %p124 = scmp.eq.s32.totalorder %s18, 1
      %p125 = por %p123, %p124
      %p127 = scmp.ne.s32.totalorder %s110, %s126
      %p128 = scmp.eq.s32.totalorder %s18, 0
      %p129 = por %p127, %p128
      %p130 = scmp.le.s32.totalorder 1, %s12
      %p131 = scmp.lt.s32.totalorder %s12, 3
      %p132 = pnand %p130, %p131
      %p133 = pneg %p132
      // Predicated region
      $region9: #{tpu_custom_call.1} parent=5 // pred_check
        _
      $region10: #{tpu_custom_call.1} parent=5 // pred_check_branch
        %135 = sbr.rel (%p132) target = $region12
      $region11: #{tpu_custom_call.1} parent=5 // pred_region
        %s136 = ssub.s32 %s12, 1
        // Predicated region
        $region13: #{tpu_custom_call.1} parent=11 // pred_check
          %p137 = pneg %p73
        $region14: #{tpu_custom_call.1} parent=11 // pred_check_branch
          %139 = sbr.rel (%p137) target = $region16
        $region15: #{tpu_custom_call.1} parent=11 // pred_region
          _
        $region16: #{tpu_custom_call.1} parent=11 // pred_fallthru
          _
        // Predicated region
        $region17: #{tpu_custom_call.1} parent=11 // pred_check
          %p140 = pneg %p94
        $region18: #{tpu_custom_call.1} parent=11 // pred_check_branch
          %142 = sbr.rel (%p140) target = $region20
        $region19: #{tpu_custom_call.1} parent=11 // pred_region
          _
        $region20: #{tpu_custom_call.1} parent=11 // pred_fallthru
          _
      $region12: #{tpu_custom_call.1} parent=5 // pred_fallthru
        _
      %p143 = scmp.lt.s32.totalorder %s12, 2
      // Predicated region
      $region21: #{tpu_custom_call.1} parent=5 // pred_check
        %p144 = pneg %p143
      $region22: #{tpu_custom_call.1} parent=5 // pred_check_branch
        %146 = sbr.rel (%p144) target = $region24
      $region23: #{tpu_custom_call.1} parent=5 // pred_region
        // Predicated region
        $region25: #{tpu_custom_call.1} parent=23 // pred_check
          %p147 = pneg %p46
        $region26: #{tpu_custom_call.1} parent=23 // pred_check_branch
          %149 = sbr.rel (%p147) target = $region28
        $region27: #{tpu_custom_call.1} parent=23 // pred_region
          %p150 = scmp.lt.s32.totalorder %s19, 0
          %s151 = scalar_select %p150, %s19, 0
          %p152 = scmp.lt.s32.totalorder %s20, 1
          %s153 = scalar_select %p152, %s20, 1
          %s154 = smul.addr %s151, 2
          %s155 = sadd.s32 %s153, %s154
          %s156 = smul.addr %s155, 8
          %s157 = scalar_lea.vmem %s0, %s156
        $region28: #{tpu_custom_call.1} parent=23 // pred_fallthru
          _
      $region24: #{tpu_custom_call.1} parent=5 // pred_fallthru
        _
      %p158 = scmp.le.s32.totalorder 1, %s12
      %p159 = scmp.lt.s32.totalorder %s12, 3
      %p160 = pnand %p158, %p159
      %p161 = pneg %p160
      // Predicated region
      $region29: #{tpu_custom_call.1} parent=5 // pred_check
        _
      $region30: #{tpu_custom_call.1} parent=5 // pred_check_branch
        %163 = sbr.rel (%p160) target = $region32
      $region31: #{tpu_custom_call.1} parent=5 // pred_region
        %s164 = ssub.s32 %s12, 1
        %p165 = scmp.lt.s32.totalorder %s21, 0
        %s166 = scalar_select %p165, %s21, 0
        %p167 = scmp.lt.s32.totalorder %s22, 1
        %s168 = scalar_select %p167, %s22, 1
        %s169 = smul.addr %s166, 2
        %s170 = sadd.s32 %s168, %s169
        %s171 = smul.addr %s170, 8
        %s172 = scalar_lea.vmem %s0, %s171
        %p173 = pneg %p52
        %p174 = pneg %p49
        %p175 = pneg %p73
        %p176 = pneg %p70
        %p177 = pneg %p94
        %p178 = pneg %p91
        %p179 = pneg %p122
        %p180 = pneg %p119
        %s181 = sand.u32 %s109, 1
        %s182 = scalar_lea.sflag [#allocation3], %s181
        %s183 = sand.u32 %s109, 1
        %s184 = smul.addr %s183, 8
        %s185 = scalar_lea.vmem [#allocation2], %s184
        %p186 = scmp.lt.s32.totalorder %s21, 0
        %s187 = scalar_select %p186, %s21, 0
        %p188 = scmp.lt.s32.totalorder %s22, 1
        %s189 = scalar_select %p188, %s22, 1
        %s190 = smul.addr %s187, 2
        %s191 = sadd.s32 %s189, %s190
        %s192 = smul.addr %s191, 8
        %s193 = scalar_lea.vmem %s0, %s192
        %s194 = smul.u32 %s21, 8
        %s195 = scalar_lea.vmem %s1, %s194
        %v196 = vld [vmem:[%s195] sm:$0xff]
        %s197 = scalar_lea.vmem %s2, %s194
        %v198 = vld [vmem:[%s197] sm:$0xff]
        %v199 = vld [vmem:[%s193] sm:$0xff]
        %201 = vset.pattern.permute.xlu0 0
        %202 = vperm.xlu0 %201, %v196
        %v203 = vpop.permute.xlu0 %202
        %v205 = vmul.f32 %v199, %v203
        %207 = vset.pattern.permute.xlu0 0
        %208 = vperm.xlu0 %207, %v198
        %v209 = vpop.permute.xlu0 %208
        %v211 = vadd.f32 %v205, %v209
        %212 = vst [vmem:[%s185] sm:$0xff] %v211
        %s213 = sand.u32 %s109, 1
        %s214 = scalar_lea.sflag [#allocation3], %s213
        %s215 = sand.u32 %s109, 1
        %s216 = smul.addr %s215, 8
        %s217 = scalar_lea.vmem [#allocation2], %s216
        // Predicated region
        $region33: #{tpu_custom_call.1} parent=31 // pred_check
          %p218 = pneg %p119
        $region34: #{tpu_custom_call.1} parent=31 // pred_check_branch
          %220 = sbr.rel (%p218) target = $region36
        $region35: #{tpu_custom_call.1} parent=31 // pred_region
          %s222 = ssub.s32 128, 128
          %223 = vsyncadd %s214, %s222
          %s224 = smul.addr %s21, 2
          %s225 = sadd.s32 %s22, %s224
          %s226 = smul.addr %s225, 128
          %s227 = scalar_lea.hbm %s3, %s226
          %s229 = sshll.u32 %s217, 4
          %s230 = int_to_ptr.vmem [resolvable:$true] %s229
          %232 = dma.vmem_to_hbm [thread:$0]  %s230, 128, %s227, %s214
        $region36: #{tpu_custom_call.1} parent=31 // pred_fallthru
          _
      $region32: #{tpu_custom_call.1} parent=5 // pred_fallthru
        _
      %p233 = scmp.le.s32.totalorder 2, %s12
      // Predicated region
      $region37: #{tpu_custom_call.1} parent=5 // pred_check
        %p234 = pneg %p233
      $region38: #{tpu_custom_call.1} parent=5 // pred_check_branch
        %236 = sbr.rel (%p234) target = $region40
      $region39: #{tpu_custom_call.1} parent=5 // pred_region
        %s237 = ssub.s32 %s12, 2
        // Predicated region
        $region41: #{tpu_custom_call.1} parent=39 // pred_check
          %p238 = pneg %p125
        $region42: #{tpu_custom_call.1} parent=39 // pred_check_branch
          %240 = sbr.rel (%p238) target = $region44
        $region43: #{tpu_custom_call.1} parent=39 // pred_region
          %s241 = sand.u32 %s110, 1
          %s242 = scalar_lea.sflag [#allocation3], %s241
          %s243 = sand.u32 %s110, 1
          %s244 = smul.addr %s243, 8
          %s245 = scalar_lea.vmem [#allocation2], %s244
          %246 = dma.done %s242, 128
        $region44: #{tpu_custom_call.1} parent=39 // pred_fallthru
          _
      $region40: #{tpu_custom_call.1} parent=5 // pred_fallthru
        _
    $region6: #{tpu_custom_call.1} parent=1 // loop_footer
      %s16 = sadd.s32 1, %s12
    $region7: #{tpu_custom_call.1} parent=1 // loop_footer_branch
      %11 = sbr.rel target = $region3
    $region8: #{tpu_custom_call.1} parent=1 // loop_exit
      _
    %247 = vsyncpa [#allocation3], 1
    %s248 = scalar_lea.sflag [#allocation3], 1
    %249 = vsyncpa %s248, 1

</llo_original>
